<compile_context>
chip_gen: v6e
topology: v6e:2x2x1
jax: 0.10.0
libtpu: 0.0.40
codegen_flags: <defaults>
</compile_context>

<pallas_src>
import jax
import jax.numpy as jnp
from jax.experimental import pallas as pl
from jax.experimental.pallas import tpu as pltpu


def _rcab_fused_kernel(x_ref, halo_ref, w_ref, o_ref):
    # x_ref   : (1, Cin, TS)       row-tile of NCHW-flat input, TS = tile_rows * W lanes
    # halo_ref: (1, 1, Cin, 2*W)   [row above | row below] for this tile (zeros at borders)
    # w_ref   : (3, Cout, 3*Cin)   fused 3x3 weights; w_ref[kw] columns ordered (kh, cin)
    # o_ref   : (1, Cout, TS)
    TS = x_ref.shape[2]
    W = halo_ref.shape[3] // 2

    xc = x_ref[0]                       # (Cin, TS)
    up = halo_ref[0, 0, :, :W]          # (Cin, W)  image row above the tile
    dn = halo_ref[0, 0, :, W:]          # (Cin, W)  image row below the tile

    # Row-shifted slabs (one image row == W lanes).  Halo rows already carry the zero
    # boundary, so no row masking is needed.  Stack once to (3*Cin, TS) so the column
    # shifts below need only 2 rolls + 2 selects total (not 6) -- roughly half the VMEM
    # store traffic of materializing a (9*Cin, TS) im2col.
    x_up = jnp.concatenate([up, xc[:, :TS - W]], axis=1)      # x[h-1, w]
    x_dn = jnp.concatenate([xc[:, W:], dn], axis=1)           # x[h+1, w]
    rows = jnp.concatenate([x_up, xc, x_dn], axis=0)          # (3*Cin, TS), kh-major

    # Column edge masks for the +/-1 lane shifts (w-1 < 0 / w+1 >= W fall off the image;
    # tiles start on row boundaries, so pltpu.roll wrap-around lands on a masked lane).
    col = jax.lax.broadcasted_iota(jnp.int32, (1, TS), 1) % W
    not_left = col != 0
    not_right = col != W - 1
    zero = jnp.zeros((), dtype=rows.dtype)

    # Three accumulating MXU matmuls (K = 3*Cin), f32 accumulation.  MXU has large
    # slack here (kernel is HBM-bound, M = Cout << 128/256), so the extra matmuls are
    # free while each shifted slab is consumed immediately after it is built.
    acc = jnp.dot(w_ref[1], rows, preferred_element_type=jnp.float32)          # kw = 1
    left = jnp.where(not_left, pltpu.roll(rows, 1, axis=1), zero)              # x[.., w-1]
    acc += jnp.dot(w_ref[0], left, preferred_element_type=jnp.float32)         # kw = 0
    right = jnp.where(not_right, pltpu.roll(rows, TS - 1, axis=1), zero)       # x[.., w+1]
    acc += jnp.dot(w_ref[2], right, preferred_element_type=jnp.float32)        # kw = 2

    o_ref[...] = acc.astype(o_ref.dtype)[None]


def _fuse_weights(w_dense, w_dense_1x1, w_1x1):
    """Collapse conv3x3(C->16C) . conv1x1(16C->C) + residual conv1x1 into one 3x3 weight.

    Returns (3, Cout, 3*Cin): one slab per kw, columns ordered (kh, cin).  Fusion in f32.
    """
    wf = jnp.einsum("oe,eihw->oihw",
                    w_dense_1x1[:, :, 0, 0].astype(jnp.float32),
                    w_dense.astype(jnp.float32))                    # (Cout, Cin, 3, 3)
    wf = wf.at[:, :, 1, 1].add(w_1x1[:, :, 0, 0].astype(jnp.float32))
    cout, cin = wf.shape[0], wf.shape[1]
    # (Cout, Cin, KH, KW) -> (KW, Cout, KH, Cin) -> (KW, Cout, KH*Cin)
    return jnp.transpose(wf, (3, 0, 2, 1)).reshape(3, cout, 3 * cin)


def _step_vmem_bytes(C, Cout, tile_rows, W, itemsize):
    """Honest per-grid-step VMEM footprint: double-buffered IO blocks plus the kernel's
    own intermediates (x_up/x_dn, stacked rows, left/right slabs, f32 accumulator)."""
    ts = tile_rows * W
    io = 2 * (C * ts + 2 * C * W + 3 * Cout * 3 * C + Cout * ts) * itemsize
    interm = (2 + 3 + 6) * C * ts * itemsize
    acc = Cout * ts * 4
    return io + interm + acc


def _vmem_capacity_bytes():
    try:
        return pltpu.get_tpu_info().vmem_capacity_bytes
    except Exception:           # non-TPU tracing / older runtime: assume smallest (v7x)
        return 64 << 20


def _vmem_budget_bytes():
    """Generation-aware per-step budget: ~1/3 of physical VMEM, capped.
    v7x (64 MiB) -> ~22 MiB; v5e/v6e (128 MiB) -> ~44 MiB."""
    cap = _vmem_capacity_bytes()
    return max(8 << 20, min(int(cap * 0.35), 44 << 20))


def _pick_tile_rows(N, H, W, C, Cout, itemsize, vmem_budget_bytes):
    """Largest row-tile whose *true* per-step footprint fits the budget, keeping the
    lane dim (tile_rows*W) a multiple of 128 (or the full image), preferring an even
    total grid when N is odd so v7x's two TensorCores split the work evenly."""
    divisors = [d for d in range(1, H + 1) if H % d == 0]
    lane_ok = [d for d in divisors if (d * W) % 128 == 0 or d == H]
    feasible = [d for d in lane_ok
                if _step_vmem_bytes(C, Cout, d, W, itemsize) <= vmem_budget_bytes]
    if not feasible:   # nothing fits the budget: take the smallest-footprint legal tile
        feasible = [min(lane_ok, key=lambda d: _step_vmem_bytes(C, Cout, d, W, itemsize))]
    balanced = [d for d in feasible if (N * (H // d)) % 2 == 0]
    pool = balanced if balanced else feasible
    return max(pool)


def rcab_forward(x_nchw, w_dense, w_dense_1x1, w_1x1, *,
                 compute_dtype=jnp.bfloat16, tile_rows=None):
    """RCAB forward (non-deploy branch of SESR's RCAB).

    x_nchw      : (N, C, H, W)     float32 (PyTorch NCHW layout, kept end to end)
    w_dense     : (16*C, C, 3, 3)  PyTorch OIHW
    w_dense_1x1 : (C, 16*C, 1, 1)
    w_1x1       : (C, C, 1, 1)
    returns     : (N, C, H, W) in compute_dtype
    """
    N, C, H, W = x_nchw.shape
    Cout = w_dense_1x1.shape[0]
    assert w_dense.shape[1] == C and w_1x1.shape == (Cout, C, 1, 1)

    itemsize = jnp.dtype(compute_dtype).itemsize
    if tile_rows is None:
        tile_rows = _pick_tile_rows(N, H, W, C, Cout, itemsize, _vmem_budget_bytes())
    assert H % tile_rows == 0, "tile_rows must divide H"
    TS = tile_rows * W
    HW = H * W
    assert TS % 128 == 0 or TS == HW, "row-tile must be lane-dense or the full image"
    nt = H // tile_rows

    x = x_nchw.astype(compute_dtype)
    w_kw = _fuse_weights(w_dense, w_dense_1x1, w_1x1).astype(compute_dtype)  # (3, Cout, 3C)

    # Packed halo: one (N, nt, C, 2*W) side input = [row above | row below] per row-tile,
    # zeros at the image border.  Touches only 2/tile_rows of the input and costs a
    # single small DMA per grid step.
    zero_row = jnp.zeros((N, C, 1, W), compute_dtype)
    up_rows = jnp.concatenate([zero_row, x[:, :, tile_rows - 1:H - 1:tile_rows, :]], axis=2)
    dn_rows = jnp.concatenate([x[:, :, tile_rows:H:tile_rows, :], zero_row], axis=2)
    halo = jnp.transpose(jnp.concatenate([up_rows, dn_rows], axis=3), (0, 2, 1, 3))

    x_flat = x.reshape(N, C, HW)   # free reshape: NCHW is already channel-major contiguous

    step_bytes = _step_vmem_bytes(C, Cout, tile_rows, W, itemsize)
    vmem_limit = int(min(max(int(step_bytes * 1.4) + (2 << 20), 32 << 20),
                         int(_vmem_capacity_bytes() * 0.9)))

    cost = pl.CostEstimate(
        flops=2 * N * HW * Cout * 9 * C,
        bytes_accessed=itemsize * (N * C * HW + N * Cout * HW
                                   + N * nt * C * 2 * W + 9 * Cout * C),
        transcendentals=0)

    out_flat = pl.pallas_call(
        _rcab_fused_kernel,
        out_shape=jax.ShapeDtypeStruct((N, Cout, HW), compute_dtype),
        grid_spec=pltpu.PrefetchScalarGridSpec(
            num_scalar_prefetch=0,
            grid=(N, nt),
            in_specs=[
                # TODO(synk): if xprof ever shows exposed input DMA on v7x, add
                # pipeline_mode=pl.Buffered(3) to this x_flat spec.
                pl.BlockSpec((1, C, TS), lambda n, t: (n, 0, t)),
                pl.BlockSpec((1, 1, C, 2 * W), lambda n, t: (n, t, 0, 0)),
                pl.BlockSpec((3, Cout, 3 * C), lambda n, t: (0, 0, 0)),
            ],
            out_specs=pl.BlockSpec((1, Cout, TS), lambda n, t: (n, 0, t)),
        ),
        compiler_params=pltpu.CompilerParams(
            dimension_semantics=("parallel", "parallel"),
            vmem_limit_bytes=vmem_limit),
        cost_estimate=cost,
    )(x_flat, halo, w_kw)

    return out_flat.reshape(N, Cout, H, W)


def _reference_forward(x, w_dense, w_dense_1x1, w_1x1):
    """Pure-JAX reference (unfused lax convs), NCHW f32, for correctness check."""
    dn = jax.lax.conv_dimension_numbers(x.shape, w_dense.shape,
                                        ("NCHW", "OIHW", "NCHW"))
    y = jax.lax.conv_general_dilated(x, w_dense, (1, 1), ((1, 1), (1, 1)),
                                     dimension_numbers=dn)
    y = jax.lax.conv_general_dilated(y, w_dense_1x1, (1, 1), ((0, 0), (0, 0)),
                                     dimension_numbers=dn)
    r = jax.lax.conv_general_dilated(x, w_1x1, (1, 1), ((0, 0), (0, 0)),
                                     dimension_numbers=dn)
    return y + r


if __name__ == "__main__":
    key = jax.random.PRNGKey(0)
    N, C, H, W = 2, 4, 16, 16      # n_feat = 4
    r = 16
    Cexp = r * C                   # 64

    k_x, k_w3, k_wd1, k_w1 = jax.random.split(key, 4)
    x = jax.random.normal(k_x, (N, C, H, W), dtype=jnp.float32)
    w_dense = jax.random.normal(k_w3, (Cexp, C, 3, 3), dtype=jnp.float32) * 0.1
    w_dense_1x1 = jax.random.normal(k_wd1, (C, Cexp, 1, 1), dtype=jnp.float32) * 0.1
    w_1x1 = jax.random.normal(k_w1, (C, C, 1, 1), dtype=jnp.float32) * 0.1

    ref = jax.block_until_ready(_reference_forward(x, w_dense, w_dense_1x1, w_1x1))

    # f32 path, auto tile size (full image per block at this toy size) -> tight check.
    out_f32 = jax.block_until_ready(
        rcab_forward(x, w_dense, w_dense_1x1, w_1x1, compute_dtype=jnp.float32))
    assert out_f32.shape == (N, C, H, W)
    assert jnp.allclose(out_f32, ref, atol=1e-4, rtol=1e-4)

    # bf16 path with explicit spatial tiling (2 row-tiles -> grid (N, 2)) -> loose check.
    out_bf16 = jax.block_until_ready(
        rcab_forward(x, w_dense, w_dense_1x1, w_1x1,
                     compute_dtype=jnp.bfloat16, tile_rows=8))
    assert out_bf16.shape == (N, C, H, W)
    assert jnp.allclose(out_bf16.astype(jnp.float32), ref, atol=5e-2, rtol=5e-2)

    print("KERNEL_OK")
</pallas_src>

<mosaic_0001>
module attributes {stable_mosaic.version = 11 : i64} {
  func.func @_rcab_fused_kernel(%arg0: i32, %arg1: i32, %arg2: memref<1x4x256xf32, #tpu.memory_space<vmem>>, %arg3: memref<1x1x4x32xf32, #tpu.memory_space<vmem>>, %arg4: memref<3x4x12xf32, #tpu.memory_space<vmem>>, %arg5: memref<1x4x256xf32, #tpu.memory_space<vmem>>) attributes {dimension_semantics = [#tpu.dimension_semantics<parallel>, #tpu.dimension_semantics<parallel>], iteration_bounds = array<i64: 2, 1>, scalar_prefetch = 0 : i64, scratch_operands = 0 : i64, tpu.core_type = #tpu.core_type<tc>, window_params = [{transform_indices = @transform_0, window_bounds = array<i64: 1, 4, 256>}, {transform_indices = @transform_1, window_bounds = array<i64: 1, 1, 4, 32>}, {pipeline_mode = #tpu.pipeline_mode<synchronous>, transform_indices = @transform_2, window_bounds = array<i64: 3, 4, 12>}, {transform_indices = @transform_3, window_bounds = array<i64: 1, 4, 256>}]} {
    %c0 = arith.constant 0 : index
    %c0_0 = arith.constant 0 : index
    %c0_1 = arith.constant 0 : index
    %0 = vector.load %arg2[%c0, %c0_0, %c0_1] : memref<1x4x256xf32, #tpu.memory_space<vmem>>, vector<1x4x256xf32>
    %1 = vector.shape_cast %0 : vector<1x4x256xf32> to vector<4x256xf32>
    %c0_2 = arith.constant 0 : index
    %c0_3 = arith.constant 0 : index
    %c0_4 = arith.constant 0 : index
    %c0_5 = arith.constant 0 : index
    %2 = vector.load %arg3[%c0_2, %c0_3, %c0_4, %c0_5] : memref<1x1x4x32xf32, #tpu.memory_space<vmem>>, vector<1x1x4x16xf32>
    %3 = vector.shape_cast %2 : vector<1x1x4x16xf32> to vector<4x16xf32>
    %c0_6 = arith.constant 0 : index
    %c0_7 = arith.constant 0 : index
    %c0_8 = arith.constant 0 : index
    %c16 = arith.constant 16 : index
    %4 = vector.load %arg3[%c0_6, %c0_7, %c0_8, %c16] : memref<1x1x4x32xf32, #tpu.memory_space<vmem>>, vector<1x1x4x16xf32>
    %5 = vector.shape_cast %4 : vector<1x1x4x16xf32> to vector<4x16xf32>
    %6 = vector.extract_strided_slice %1 {offsets = [0, 0], sizes = [4, 240], strides = [1, 1]} : vector<4x256xf32> to vector<4x240xf32>
    %7 = tpu.concatenate %3, %6 in 1 : vector<4x16xf32>, vector<4x240xf32> -> vector<4x256xf32>
    %8 = vector.extract_strided_slice %1 {offsets = [0, 16], sizes = [4, 240], strides = [1, 1]} : vector<4x256xf32> to vector<4x240xf32>
    %9 = tpu.concatenate %8, %5 in 1 : vector<4x240xf32>, vector<4x16xf32> -> vector<4x256xf32>
    %10 = tpu.concatenate %7, %1, %9 in 0 : vector<4x256xf32>, vector<4x256xf32>, vector<4x256xf32> -> vector<12x256xf32>
    %11 = tpu.iota {dimensions = array<i32: 1>} : vector<1x256xi32>
    %c16_i32 = arith.constant 16 : i32
    %c0_i32 = arith.constant 0 : i32
    %12 = arith.cmpi eq, %c16_i32, %c0_i32 : i32
    %c1_i32 = arith.constant 1 : i32
    %13 = arith.select %12, %c1_i32, %c16_i32 : i32
    %14 = vector.broadcast %13 : i32 to vector<1x256xi32>
    %15 = arith.remsi %11, %14 : vector<1x256xi32>
    %c0_i32_9 = arith.constant 0 : i32
    %16 = vector.broadcast %c0_i32_9 : i32 to vector<1x256xi32>
    %17 = arith.cmpi ne, %15, %16 : vector<1x256xi32>
    %c0_i32_10 = arith.constant 0 : i32
    %18 = vector.broadcast %c0_i32_10 : i32 to vector<1x256xi32>
    %19 = arith.cmpi slt, %15, %18 : vector<1x256xi32>
    %c0_i32_11 = arith.constant 0 : i32
    %20 = arith.cmpi slt, %13, %c0_i32_11 : i32
    %21 = vector.broadcast %20 : i1 to vector<1x256xi1>
    %22 = vector.broadcast %21 : vector<1x256xi1> to vector<1x256xi1>
    %23 = arith.xori %19, %22 : vector<1x256xi1>
    %24 = arith.andi %23, %17 : vector<1x256xi1>
    %25 = vector.broadcast %13 : i32 to vector<1x256xi32>
    %26 = arith.addi %15, %25 : vector<1x256xi32>
    %27 = arith.select %24, %26, %15 : vector<1x256xi1>, vector<1x256xi32>
    %c0_i32_12 = arith.constant 0 : i32
    %28 = vector.broadcast %c0_i32_12 : i32 to vector<1x256xi32>
    %29 = arith.cmpi ne, %27, %28 : vector<1x256xi32>
    %c15_i32 = arith.constant 15 : i32
    %30 = vector.broadcast %c15_i32 : i32 to vector<1x256xi32>
    %31 = arith.cmpi ne, %27, %30 : vector<1x256xi32>
    %c1 = arith.constant 1 : index
    %c0_13 = arith.constant 0 : index
    %c0_14 = arith.constant 0 : index
    %32 = vector.load %arg4[%c1, %c0_13, %c0_14] : memref<3x4x12xf32, #tpu.memory_space<vmem>>, vector<1x4x12xf32>
    %33 = vector.shape_cast %32 : vector<1x4x12xf32> to vector<4x12xf32>
    %cst = arith.constant dense<0.000000e+00> : vector<4x256xf32>
    %34 = tpu.matmul %33, %10, %cst {dimension_numbers = #tpu.dot_dimension_numbers<[1], [0], [0], [1], [0, 0, 1, 1], [], []>} : vector<4x12xf32>, vector<12x256xf32>, vector<4x256xf32> -> vector<4x256xf32>
    %c1_i32_15 = arith.constant 1 : i32
    %35 = tpu.dynamic_rotate %10 by %c1_i32_15 dim 1 : vector<12x256xf32>, i32 -> vector<12x256xf32>
    %cst_16 = arith.constant 0.000000e+00 : f32
    %36 = vector.shape_cast %29 : vector<1x256xi1> to vector<1x256xi1>
    %37 = vector.broadcast %36 : vector<1x256xi1> to vector<12x256xi1>
    %38 = vector.broadcast %cst_16 : f32 to vector<12x256xf32>
    %39 = arith.select %37, %35, %38 : vector<12x256xi1>, vector<12x256xf32>
    %c0_17 = arith.constant 0 : index
    %c0_18 = arith.constant 0 : index
    %c0_19 = arith.constant 0 : index
    %40 = vector.load %arg4[%c0_17, %c0_18, %c0_19] : memref<3x4x12xf32, #tpu.memory_space<vmem>>, vector<1x4x12xf32>
    %41 = vector.shape_cast %40 : vector<1x4x12xf32> to vector<4x12xf32>
    %cst_20 = arith.constant dense<0.000000e+00> : vector<4x256xf32>
    %42 = tpu.matmul %41, %39, %cst_20 {dimension_numbers = #tpu.dot_dimension_numbers<[1], [0], [0], [1], [0, 0, 1, 1], [], []>} : vector<4x12xf32>, vector<12x256xf32>, vector<4x256xf32> -> vector<4x256xf32>
    %43 = arith.addf %34, %42 : vector<4x256xf32>
    %c255_i32 = arith.constant 255 : i32
    %44 = tpu.dynamic_rotate %10 by %c255_i32 dim 1 : vector<12x256xf32>, i32 -> vector<12x256xf32>
    %cst_21 = arith.constant 0.000000e+00 : f32
    %45 = vector.shape_cast %31 : vector<1x256xi1> to vector<1x256xi1>
    %46 = vector.broadcast %45 : vector<1x256xi1> to vector<12x256xi1>
    %47 = vector.broadcast %cst_21 : f32 to vector<12x256xf32>
    %48 = arith.select %46, %44, %47 : vector<12x256xi1>, vector<12x256xf32>
    %c2 = arith.constant 2 : index
    %c0_22 = arith.constant 0 : index
    %c0_23 = arith.constant 0 : index
    %49 = vector.load %arg4[%c2, %c0_22, %c0_23] : memref<3x4x12xf32, #tpu.memory_space<vmem>>, vector<1x4x12xf32>
    %50 = vector.shape_cast %49 : vector<1x4x12xf32> to vector<4x12xf32>
    %cst_24 = arith.constant dense<0.000000e+00> : vector<4x256xf32>
    %51 = tpu.matmul %50, %48, %cst_24 {dimension_numbers = #tpu.dot_dimension_numbers<[1], [0], [0], [1], [0, 0, 1, 1], [], []>} : vector<4x12xf32>, vector<12x256xf32>, vector<4x256xf32> -> vector<4x256xf32>
    %52 = arith.addf %43, %51 : vector<4x256xf32>
    %53 = vector.shape_cast %52 : vector<4x256xf32> to vector<1x4x256xf32>
    %c0_25 = arith.constant 0 : index
    %c0_26 = arith.constant 0 : index
    %c0_27 = arith.constant 0 : index
    %54 = vector.load %arg5[%c0_25, %c0_26, %c0_27] : memref<1x4x256xf32, #tpu.memory_space<vmem>>, vector<1x4x256xf32>
    tpu.vector_store %arg5[%c0_25, %c0_26, %c0_27], %53 {strides = array<i32>} : memref<1x4x256xf32, #tpu.memory_space<vmem>>, vector<1x4x256xf32>,
    return
  }
  func.func @transform_0(%arg0: i32, %arg1: i32) -> (i32, i32, i32) {
    %c0_i32 = arith.constant 0 : i32
    %c0_i32_0 = arith.constant 0 : i32
    return %arg0, %c0_i32, %arg1 : i32, i32, i32
  }
  func.func @transform_1(%arg0: i32, %arg1: i32) -> (i32, i32, i32, i32) {
    %c0_i32 = arith.constant 0 : i32
    %c0_i32_0 = arith.constant 0 : i32
    %c0_i32_1 = arith.constant 0 : i32
    return %arg0, %arg1, %c0_i32, %c0_i32_0 : i32, i32, i32, i32
  }
  func.func @transform_2(%arg0: i32, %arg1: i32) -> (i32, i32, i32) {
    %c0_i32 = arith.constant 0 : i32
    %c0_i32_0 = arith.constant 0 : i32
    %c0_i32_1 = arith.constant 0 : i32
    %c0_i32_2 = arith.constant 0 : i32
    return %c0_i32, %c0_i32_0, %c0_i32_1 : i32, i32, i32
  }
  func.func @transform_3(%arg0: i32, %arg1: i32) -> (i32, i32, i32) {
    %c0_i32 = arith.constant 0 : i32
    %c0_i32_0 = arith.constant 0 : i32
    return %arg0, %c0_i32, %arg1 : i32, i32, i32
  }
}

</mosaic_0001>

<llo_original>
// kernel: tpu_custom_call.1
$region0: #{tpu_custom_call.1}
  #allocation0 [shape = 'u32[]', space=smem, size = 0x4, offset = 0x4, fixed_abs, tag = 'smem constant byte address 0x4 - core index']
  #allocation1 [shape = 'u32[144,128]{1,0:T(1,128)}', space=vmem, size = 0x12000, scoped, tag = 'internal scratch']
  %s0 = inlined_call_operand.hbm [shape: f32[2,4,256], index: 0, kind: input, shape index: {}]
  %s1 = inlined_call_operand.hbm [shape: f32[2,1,4,32], index: 1, kind: input, shape index: {}]
  %s2 = inlined_call_operand.hbm [shape: f32[3,4,12], index: 2, kind: input, shape index: {}]
  %s3 = inlined_call_operand.hbm [shape: f32[2,4,256], index: 3, kind: output, shape index: {}]
  %s4 = sld [smem:[#allocation0]]
  $region57: #{tpu_custom_call.1} parent=0
    _
  %s6 = ssub.s32 1, %s4
  %s7 = scalar_select 0, %s6, %s4
  $region1: #{tpu_custom_call.1} parent=0
    #allocation2 [shape = 'u8[8192]{0}', space=vmem, size = 0x2000, scoped, tag = 'input window, operand 0']
    #allocation3 [shape = 's32[2]{0}', space=sflag, size = 0x8, scoped, tag = 'scoped memory for tpu_custom_call.1']
    #allocation4 [shape = 's32[2]{0}', space=sflag, size = 0x8, scoped, tag = 'scoped memory for tpu_custom_call.1']
    #allocation5 [shape = 'u8[4096]{0}', space=vmem, size = 0x1000, scoped, tag = 'input window, operand 1']
    #allocation6 [shape = 's32[2]{0}', space=sflag, size = 0x8, scoped, tag = 'scoped memory for tpu_custom_call.1']
    #allocation7 [shape = 'u8[6144]{0}', space=vmem, size = 0x1800, scoped, tag = 'input window, operand 2, single buffered']
    #allocation8 [shape = 'u8[8192]{0}', space=vmem, size = 0x2000, scoped, tag = 'output window, operand 0']
    %8 = vsyncpa [#allocation3], 0
    %s9 = scalar_lea.sflag [#allocation3], 1
    %10 = vsyncpa %s9, 0
    %11 = vsyncpa [#allocation6], 0
    %s12 = scalar_lea.sflag [#allocation6], 1
    %13 = vsyncpa %s12, 0
    %14 = vsyncpa [#allocation4], 0
    %s15 = scalar_lea.sflag [#allocation4], 1
    %16 = vsyncpa %s15, 0
    loop: start=0, step=1, limit=4
    $region2: #{tpu_custom_call.1} parent=1 // loop_pre_header
      _
    $region3: #{tpu_custom_call.1} parent=1 // loop_header
      %s18 = sphi 0, %s22
      %p19 = scmp.ge.s32.totalorder %s18, 4
      %s25 = sphi 0, %s37
      %s26 = sphi 0, %s33
      %s27 = sphi 0, %s25
      %s28 = sphi 0, %s26
      %s29 = sphi 0, %s27
      %s30 = sphi 0, %s28
      %s42 = sphi 0, %s44
      %s45 = sphi 0, %s42
      %s46 = sphi 0, %s45
      %s62 = sphi 0, %s46
      %s70 = sphi 0, %s72
      %s73 = sphi 0, %s70
      %s74 = sphi 0, %s73
      %s90 = sphi 0, %s74
      %s94 = sphi 0, %s94
      %s96 = sphi 0, %s94
      %s97 = sphi 0, %s96
      %s111 = sphi 0, %s97
      %s119 = sphi 0, %s121
      %s122 = sphi 0, %s119
      %s123 = sphi 0, %s122
      %s139 = sphi 0, %s123
    $region4: #{tpu_custom_call.1} parent=1 // loop_header_branch
      %21 = sbr.rel (%p19) target = $region8
    $region5: #{tpu_custom_call.1} parent=1 // loop_body
      %s23 = ssub.s32 %s18, 1
      %s24 = ssub.s32 %s18, 2
      %s31 = sadd.s32 1, %s26
      %p32 = scmp.ge.s32.totalorder %s31, 1
      %s33 = scalar_select %p32, 0, %s31
      %s34 = sadd.s32 1, %s25
      %s35 = scalar_select %p32, %s34, %s25
      %p36 = scmp.ge.s32.totalorder %s35, 2
      %s37 = scalar_select %p36, 0, %s35
      %s38 = ssub.s32 %s25, %s37
      %s39 = ssub.s32 %s26, %s33
      %s40 = sor.u32 %s38, %s39
      %p41 = scmp.eq.s32.totalorder %s40, 0
      %s43 = sadd.s32 %s42, 1
      %s44 = scalar_select %p41, %s42, %s43
      %p47 = pneg %p41
      %p48 = scmp.eq.s32.totalorder %s18, 1
      %p49 = por %p47, %p48
      %p50 = scmp.ne.s32.totalorder %s42, %s45
      %p51 = scmp.eq.s32.totalorder %s18, 0
      %p52 = por %p50, %p51
      %p53 = scmp.ne.s32.totalorder %s42, %s45
      %p54 = scmp.eq.s32.totalorder %s23, 1
      %p55 = por %p53, %p54
      %p56 = scmp.ne.s32.totalorder %s45, %s46
      %p57 = scmp.eq.s32.totalorder %s23, 0
      %p58 = por %p56, %p57
      %p59 = scmp.ne.s32.totalorder %s45, %s46
      %p60 = scmp.eq.s32.totalorder %s24, 1
      %p61 = por %p59, %p60
      %p63 = scmp.ne.s32.totalorder %s46, %s62
      %p64 = scmp.eq.s32.totalorder %s24, 0
      %p65 = por %p63, %p64
      %s66 = ssub.s32 %s25, %s37
      %s67 = ssub.s32 %s26, %s33
      %s68 = sor.u32 %s66, %s67
      %p69 = scmp.eq.s32.totalorder %s68, 0
      %s71 = sadd.s32 %s70, 1
      %s72 = scalar_select %p69, %s70, %s71
      %p75 = pneg %p69
      %p76 = scmp.eq.s32.totalorder %s18, 1
      %p77 = por %p75, %p76
      %p78 = scmp.ne.s32.totalorder %s70, %s73
      %p79 = scmp.eq.s32.totalorder %s18, 0
      %p80 = por %p78, %p79
      %p81 = scmp.ne.s32.totalorder %s70, %s73
      %p82 = scmp.eq.s32.totalorder %s23, 1
      %p83 = por %p81, %p82
      %p84 = scmp.ne.s32.totalorder %s73, %s74
      %p85 = scmp.eq.s32.totalorder %s23, 0
      %p86 = por %p84, %p85
      %p87 = scmp.ne.s32.totalorder %s73, %s74
      %p88 = scmp.eq.s32.totalorder %s24, 1
      %p89 = por %p87, %p88
      %p91 = scmp.ne.s32.totalorder %s74, %s90
      %p92 = scmp.eq.s32.totalorder %s24, 0
      %p93 = por %p91, %p92
      %s95 = sadd.s32 %s94, 1
      %p98 = scmp.eq.s32.totalorder %s18, 1
      %p99 = scmp.ne.s32.totalorder %s94, %s96
      %p100 = scmp.eq.s32.totalorder %s18, 0
      %p101 = por %p99, %p100
      %p102 = scmp.ne.s32.totalorder %s94, %s96
      %p103 = scmp.eq.s32.totalorder %s23, 1
      %p104 = por %p102, %p103
      %p105 = scmp.ne.s32.totalorder %s96, %s97
      %p106 = scmp.eq.s32.totalorder %s23, 0
      %p107 = por %p105, %p106
      %p108 = scmp.ne.s32.totalorder %s96, %s97
      %p109 = scmp.eq.s32.totalorder %s24, 1
      %p110 = por %p108, %p109
      %p112 = scmp.ne.s32.totalorder %s97, %s111
      %p113 = scmp.eq.s32.totalorder %s24, 0
      %p114 = por %p112, %p113
      %s115 = ssub.s32 %s25, %s37
      %s116 = ssub.s32 %s26, %s33
      %s117 = sor.u32 %s115, %s116
      %p118 = scmp.eq.s32.totalorder %s117, 0
      %s120 = sadd.s32 %s119, 1
      %s121 = scalar_select %p118, %s119, %s120
      %p124 = pneg %p118
      %p125 = scmp.eq.s32.totalorder %s18, 1
      %p126 = por %p124, %p125
      %p127 = scmp.ne.s32.totalorder %s119, %s122
      %p128 = scmp.eq.s32.totalorder %s18, 0
      %p129 = por %p127, %p128
      %p130 = scmp.ne.s32.totalorder %s119, %s122
      %p131 = scmp.eq.s32.totalorder %s23, 1
      %p132 = por %p130, %p131
      %p133 = scmp.ne.s32.totalorder %s122, %s123
      %p134 = scmp.eq.s32.totalorder %s23, 0
      %p135 = por %p133, %p134
      %p136 = scmp.ne.s32.totalorder %s122, %s123
      %p137 = scmp.eq.s32.totalorder %s24, 1
      %p138 = por %p136, %p137
      %p140 = scmp.ne.s32.totalorder %s123, %s139
      %p141 = scmp.eq.s32.totalorder %s24, 0
      %p142 = por %p140, %p141
      %p143 = scmp.le.s32.totalorder 1, %s18
      %p144 = scmp.lt.s32.totalorder %s18, 3
      %p145 = pnand %p143, %p144
      %p146 = pneg %p145
      // Predicated region
      $region9: #{tpu_custom_call.1} parent=5 // pred_check
        _
      $region10: #{tpu_custom_call.1} parent=5 // pred_check_branch
        %148 = sbr.rel (%p145) target = $region12
      $region11: #{tpu_custom_call.1} parent=5 // pred_region
        %s149 = ssub.s32 %s18, 1
        // Predicated region
        $region13: #{tpu_custom_call.1} parent=11 // pred_check
          %p150 = pneg %p107
        $region14: #{tpu_custom_call.1} parent=11 // pred_check_branch
          %152 = sbr.rel (%p150) target = $region16
        $region15: #{tpu_custom_call.1} parent=11 // pred_region
          %s154 = ssub.s32 192, 192
          %155 = vsyncadd [#allocation6], %s154
          %s156 = sshll.u32 [#allocation7], 4
          %s157 = int_to_ptr.vmem [resolvable:$true] %s156
          %162 = dma.hbm_to_vmem [thread:$0]  %s2, 192, %s157, [#allocation6], 64, 64, 4
        $region16: #{tpu_custom_call.1} parent=11 // pred_fallthru
          _
      $region12: #{tpu_custom_call.1} parent=5 // pred_fallthru
        _
      %p163 = scmp.lt.s32.totalorder %s18, 2
      // Predicated region
      $region17: #{tpu_custom_call.1} parent=5 // pred_check
        %p164 = pneg %p163
      $region18: #{tpu_custom_call.1} parent=5 // pred_check_branch
        %166 = sbr.rel (%p164) target = $region20
      $region19: #{tpu_custom_call.1} parent=5 // pred_region
        // Predicated region
        $region21: #{tpu_custom_call.1} parent=19 // pred_check
          %p167 = pneg %p52
        $region22: #{tpu_custom_call.1} parent=19 // pred_check_branch
          %169 = sbr.rel (%p167) target = $region24
        $region23: #{tpu_custom_call.1} parent=19 // pred_region
          %s170 = sand.u32 %s42, 1
          %s171 = scalar_lea.sflag [#allocation3], %s170
          %s172 = sand.u32 %s42, 1
          %s173 = smul.addr %s172, 8
          %s174 = scalar_lea.vmem [#allocation2], %s173
          %s175 = smul.u32 2, %s26
          %s177 = ssub.s32 128, 128
          %178 = vsyncadd %s171, %s177
          %s179 = smul.addr %s25, 2
          %s180 = sadd.s32 %s175, %s179
          %s181 = smul.addr %s180, 64
          %s182 = scalar_lea.hbm %s0, %s181
          %s184 = sshll.u32 %s174, 4
          %s185 = int_to_ptr.vmem [resolvable:$true] %s184
          %187 = dma.hbm_to_vmem [thread:$0]  %s182, 128, %s185, %s171
        $region24: #{tpu_custom_call.1} parent=19 // pred_fallthru
          _
        // Predicated region
        $region25: #{tpu_custom_call.1} parent=19 // pred_check
          %p188 = pneg %p80
        $region26: #{tpu_custom_call.1} parent=19 // pred_check_branch
          %190 = sbr.rel (%p188) target = $region28
        $region27: #{tpu_custom_call.1} parent=19 // pred_region
          %s191 = sand.u32 %s18, 1
          %s192 = scalar_lea.sflag [#allocation6], %s191
          %s193 = sand.u32 %s70, 1
          %s194 = smul.addr %s193, 4
          %s195 = scalar_lea.vmem [#allocation5], %s194
          %s197 = ssub.s32 64, 64
          %198 = vsyncadd %s192, %s197
          %s199 = sadd.s32 %s26, %s25
          %s200 = smul.addr %s199, 64
          %s201 = scalar_lea.hbm %s1, %s200
          %s203 = sshll.u32 %s195, 4
          %s204 = int_to_ptr.vmem [resolvable:$true] %s203
          %206 = dma.hbm_to_vmem [thread:$0]  %s201, 64, %s204, %s192
        $region28: #{tpu_custom_call.1} parent=19 // pred_fallthru
          _
      $region20: #{tpu_custom_call.1} parent=5 // pred_fallthru
        _
      %p207 = scmp.le.s32.totalorder 1, %s18
      %p208 = scmp.lt.s32.totalorder %s18, 3
      %p209 = pnand %p207, %p208
      %p210 = pneg %p209
      // Predicated region
      $region29: #{tpu_custom_call.1} parent=5 // pred_check
        _
      $region30: #{tpu_custom_call.1} parent=5 // pred_check_branch
        %212 = sbr.rel (%p209) target = $region32
      $region31: #{tpu_custom_call.1} parent=5 // pred_region
        %s213 = ssub.s32 %s18, 1
        %s214 = sand.u32 %s45, 1
        %s215 = scalar_lea.sflag [#allocation3], %s214
        %s216 = sand.u32 %s45, 1
        %s217 = smul.addr %s216, 8
        %s218 = scalar_lea.vmem [#allocation2], %s217
        // Predicated region
        $region33: #{tpu_custom_call.1} parent=31 // pred_check
          %p219 = pneg %p58
        $region34: #{tpu_custom_call.1} parent=31 // pred_check_branch
          %221 = sbr.rel (%p219) target = $region36
        $region35: #{tpu_custom_call.1} parent=31 // pred_region
          %222 = dma.done %s215, 128
        $region36: #{tpu_custom_call.1} parent=31 // pred_fallthru
          _
        %s223 = sand.u32 %s23, 1
        %s224 = scalar_lea.sflag [#allocation6], %s223
        %s225 = sand.u32 %s73, 1
        %s226 = smul.addr %s225, 4
        %s227 = scalar_lea.vmem [#allocation5], %s226
        // Predicated region
        $region37: #{tpu_custom_call.1} parent=31 // pred_check
          %p228 = pneg %p86
        $region38: #{tpu_custom_call.1} parent=31 // pred_check_branch
          %230 = sbr.rel (%p228) target = $region40
        $region39: #{tpu_custom_call.1} parent=31 // pred_region
          %231 = dma.done %s224, 64
        $region40: #{tpu_custom_call.1} parent=31 // pred_fallthru
          _
        // Predicated region
        $region41: #{tpu_custom_call.1} parent=31 // pred_check
          %p232 = pneg %p107
        $region42: #{tpu_custom_call.1} parent=31 // pred_check_branch
          %234 = sbr.rel (%p232) target = $region44
        $region43: #{tpu_custom_call.1} parent=31 // pred_region
          %235 = dma.done [#allocation6], 192
        $region44: #{tpu_custom_call.1} parent=31 // pred_fallthru
          _
        %s236 = sand.u32 %s45, 1
        %s237 = scalar_lea.sflag [#allocation3], %s236
        %s238 = sand.u32 %s45, 1
        %s239 = smul.addr %s238, 8
        %s240 = scalar_lea.vmem [#allocation2], %s239
        %p241 = pneg %p58
        %p242 = pneg %p55
        %s243 = sand.u32 %s23, 1
        %s244 = scalar_lea.sflag [#allocation6], %s243
        %s245 = sand.u32 %s73, 1
        %s246 = smul.addr %s245, 4
        %s247 = scalar_lea.vmem [#allocation5], %s246
        %p248 = pneg %p86
        %p249 = pneg %p83
        %p250 = pneg %p107
        %p251 = pneg %p104
        %p252 = pneg %p135
        %p253 = pneg %p132
        %s254 = sand.u32 %s122, 1
        %s255 = scalar_lea.sflag [#allocation4], %s254
        %s256 = sand.u32 %s122, 1
        %s257 = smul.addr %s256, 8
        %s258 = scalar_lea.vmem [#allocation8], %s257
        %s259 = smul.u32 2, %s28
        %s260 = smul.u32 2, %s28
        %v261 = vld [vmem:[%s218] sm:$0xff]
        %v262 = vld [vmem:[%s227] sm:$0xf]
        %v264 = vcombine.high %v261, %v261
        %265 = vrot.lane.b32.xlu0 %v261, 16
        %v266 = vpop.permute.xlu0 %265
        %267 = vrot.lane.b32.xlu0 %v264, 16
        %v268 = vpop.permute.xlu0 %267
        %vm269 = vcmask 130048
        %v270 = vsel %vm269, %v266, %v268
        %v273 = vsel %vm269, %v262, %v266
        %274 = vrot.lane.b32.xlu0 %v261, 112
        %v275 = vpop.permute.xlu0 %274
        %276 = vrot.lane.b32.xlu0 %v264, 112
        %v277 = vpop.permute.xlu0 %276
        %vm278 = vcmask 916480
        %v279 = vsel %vm278, %v275, %v277
        %283 = vrot.lane.b32.xlu0 %v262, 96
        %v284 = vpop.permute.xlu0 %283
        %v286 = vsel %vm278, %v277, %v284
        %v287 = vcombine.low %v261, %v261
        %vm289 = vcmask 1043456
        %v290 = vsel %vm289, %v273, %v287
        %v291 = vsel %vm289, %v270, %v261
        %v292 = vlaneseq
        %v293 = vand.u32 %v292, 127
        %v294 = vadd.s32 %v293, 128
        %vm295 = vcmp.lt.s32.totalorder %v293, 0
        %v296 = vsub.s32 0, %v293
        %v297 = vsel %vm295, %v296, %v293
        %v298 = vshrl.u32 %v297, 4
        %v299 = vand.u32 %v297, 15
        %v300 = vsub.s32 0, %v299
        %v301 = vsel %vm295, %v300, %v299
        %vm302 = vcmp.lt.s32.totalorder %v294, 0
        %v303 = vsub.s32 0, %v294
        %v304 = vsel %vm302, %v303, %v294
        %v305 = vshrl.u32 %v304, 4
        %v306 = vand.u32 %v304, 15
        %v307 = vsub.s32 0, %v306
        %v308 = vsel %vm302, %v307, %v306
        %vm309 = vcmp.ne.s32.totalorder %v301, 0
        %vm310 = vcmp.ne.s32.totalorder %v308, 0
        %vm311 = vcmp.lt.s32.totalorder %v301, 0
        %vm312 = vcmp.lt.s32.totalorder %v308, 0
        %vm313 = vmand %vm311, %vm309
        %vm314 = vmand %vm312, %vm310
        %v315 = vadd.s32 %v301, 16
        %v316 = vadd.s32 %v308, 16
        %v317 = vsel %vm313, %v315, %v301
        %v318 = vsel %vm314, %v316, %v308
        %vm319 = vcmp.ne.s32.totalorder %v317, 0
        %vm320 = vcmp.ne.s32.totalorder %v318, 0
        %vm321 = vcmp.ne.s32.totalorder %v317, 15
        %vm322 = vcmp.ne.s32.totalorder %v318, 15
        %s323 = scalar_lea.vmem [#allocation7], 4
        %v324 = vld [vmem:[%s323] sm:$0xf]
        %325 = vrot.lane.b32.xlu0 %v290, 1
        %v326 = vpop.permute.xlu0 %325
        %327 = vrot.lane.b32.xlu0 %v279, 1
        %v328 = vpop.permute.xlu0 %327
        %329 = vrot.lane.b32.xlu0 %v291, 1
        %v330 = vpop.permute.xlu0 %329
        %331 = vrot.lane.b32.xlu0 %v286, 1
        %v332 = vpop.permute.xlu0 %331
        %vm333 = vcmp.lt.s32.totalorder %v293, 1
        %v334 = vsel %vm333, %v326, %v330
        %v335 = vsel %vm333, %v328, %v332
        %v336 = vsel %vm333, %v330, %v326
        %v337 = vsel %vm333, %v332, %v328
        %v338 = vsel %vm319, 1, 0
        %v339 = vsel %vm320, 1, 0
        %vm340 = vcmp.eq.s32.totalorder %v338, 1
        %vm341 = vcmp.eq.s32.totalorder %v339, 1
        %v342 = vsel %vm340, %v336, 0.0
        %v343 = vsel %vm341, %v334, 0.0
        %v344 = vsel %vm340, %v337, 0.0
        %v345 = vsel %vm341, %v335, 0.0
        %v346 = vld [vmem:[#allocation7] sm:$0xf]
        %vm347 = vcmask 97280
        %v349 = vsel %vm347, %v346, 0
        %v352 = vsel %vm289, %v344, 0
        %v355 = vsel %vm289, %v345, 0
        %357 = vmatprep.subr.mxu0 0.0
        %358 = vmatpush1.msra.mxu0 0.0
        %359 = vmatprep.subr.mxu0 0.0
        %360 = vmatpush1.msra.mxu0 0.0
        %361 = vmatprep.subr.mxu0 0.0
        %362 = vmatpush1.msra.mxu0 0.0
        %363 = vmatprep.subr.mxu0 0.0
        %364 = vmatpush1.msra.mxu0 0.0
        %365 = vmatprep.subr.mxu0 0.0
        %366 = vmatpush1.msra.mxu0 0.0
        %367 = vmatprep.subr.mxu0 0.0
        %368 = vmatpush1.msra.mxu0 0.0
        %369 = vmatprep.subr.mxu0 0.0
        %370 = vmatpush1.msra.mxu0 0.0
        %371 = vmatprep.subr.mxu0 0.0
        %372 = vmatpush1.msra.mxu0 0.0
        %373 = vmatprep.subr.mxu0 0.0
        %374 = vmatpush1.msra.mxu0 0.0
        %375 = vmatprep.subr.mxu0 0.0
        %376 = vmatpush1.msra.mxu0 0.0
        %377 = vmatprep.subr.mxu0 0.0
        %378 = vmatpush1.msra.mxu0 0.0
        %379 = vmatprep.subr.mxu0 0.0
        %380 = vmatpush1.msra.mxu0 0.0
        %381 = vmatprep.subr.mxu0 0.0
        %382 = vmatpush1.msra.mxu0 0.0
        %383 = vmatprep.subr.mxu0 0.0
        %384 = vmatpush1.msra.mxu0 0.0
        %385 = vmatprep.subr.mxu0 %v355
        %386 = vmatpush1.msra.mxu0 %v352
        %387 = vmatprep.subr.mxu0 %v343
        %388 = vmatpush1.msra.mxu0 %v342
        %389 = vmatprep.subr.mxu0 0.0
        %390 = vmatpush2.msra.mxu0 0.0
        %391 = vmatprep.subr.mxu0 0.0
        %392 = vmatpush2.msra.mxu0 0.0
        %393 = vmatprep.subr.mxu0 0.0
        %394 = vmatpush2.msra.mxu0 0.0
        %395 = vmatprep.subr.mxu0 0.0
        %396 = vmatpush2.msra.mxu0 0.0
        %397 = vmatprep.subr.mxu0 0.0
        %398 = vmatpush2.msra.mxu0 0.0
        %399 = vmatprep.subr.mxu0 0.0
        %400 = vmatpush2.msra.mxu0 0.0
        %401 = vmatprep.subr.mxu0 0.0
        %402 = vmatpush2.msra.mxu0 0.0
        %403 = vmatprep.subr.mxu0 0.0
        %404 = vmatpush2.msra.mxu0 0.0
        %405 = vmatprep.subr.mxu0 0.0
        %406 = vmatpush2.msra.mxu0 0.0
        %407 = vmatprep.subr.mxu0 0.0
        %408 = vmatpush2.msra.mxu0 0.0
        %409 = vmatprep.subr.mxu0 0.0
        %410 = vmatpush2.msra.mxu0 0.0
        %411 = vmatprep.subr.mxu0 0.0
        %412 = vmatpush2.msra.mxu0 0.0
        %413 = vmatprep.subr.mxu0 0.0
        %414 = vmatpush2.msra.mxu0 0.0
        %415 = vmatprep.subr.mxu0 0.0
        %416 = vmatpush2.msra.mxu0 0.0
        %417 = vmatprep.subr.mxu0 0.0
        %418 = vmatpush2.msra.mxu0 0.0
        %419 = vmatprep.subr.mxu0 0.0
        %420 = vmatpush2.msra.mxu0 0.0
        %421 = vmatprep.mubr.f32.mxu0 0.0
        %422 = vmatmul.mubr.f32.gmra.mxu0 %v349
        %v423 = vpop.f32.mrf.mxu0
        %v424 = vadd.f32 0.0, %v423
        %v425 = vpop.f32.mrf.mxu0
        %v426 = vadd.f32 0.0, %v425
        %427 = vdwg.mxu0
        %v429 = vsel %vm347, %v324, 0
        %v431 = vsel %vm289, %v279, 0
        %v434 = vsel %vm289, %v286, 0
        %436 = vmatprep.subr.mxu0 0.0
        %437 = vmatpush1.msra.mxu0 0.0
        %438 = vmatprep.subr.mxu0 0.0
        %439 = vmatpush1.msra.mxu0 0.0
        %440 = vmatprep.subr.mxu0 0.0
        %441 = vmatpush1.msra.mxu0 0.0
        %442 = vmatprep.subr.mxu0 0.0
        %443 = vmatpush1.msra.mxu0 0.0
        %444 = vmatprep.subr.mxu0 0.0
        %445 = vmatpush1.msra.mxu0 0.0
        %446 = vmatprep.subr.mxu0 0.0
        %447 = vmatpush1.msra.mxu0 0.0
        %448 = vmatprep.subr.mxu0 0.0
        %449 = vmatpush1.msra.mxu0 0.0
        %450 = vmatprep.subr.mxu0 0.0
        %451 = vmatpush1.msra.mxu0 0.0
        %452 = vmatprep.subr.mxu0 0.0
        %453 = vmatpush1.msra.mxu0 0.0
        %454 = vmatprep.subr.mxu0 0.0
        %455 = vmatpush1.msra.mxu0 0.0
        %456 = vmatprep.subr.mxu0 0.0
        %457 = vmatpush1.msra.mxu0 0.0
        %458 = vmatprep.subr.mxu0 0.0
        %459 = vmatpush1.msra.mxu0 0.0
        %460 = vmatprep.subr.mxu0 0.0
        %461 = vmatpush1.msra.mxu0 0.0
        %462 = vmatprep.subr.mxu0 0.0
        %463 = vmatpush1.msra.mxu0 0.0
        %464 = vmatprep.subr.mxu0 %v434
        %465 = vmatpush1.msra.mxu0 %v431
        %466 = vmatprep.subr.mxu0 %v291
        %467 = vmatpush1.msra.mxu0 %v290
        %468 = vmatprep.subr.mxu0 0.0
        %469 = vmatpush2.msra.mxu0 0.0
        %470 = vmatprep.subr.mxu0 0.0
        %471 = vmatpush2.msra.mxu0 0.0
        %472 = vmatprep.subr.mxu0 0.0
        %473 = vmatpush2.msra.mxu0 0.0
        %474 = vmatprep.subr.mxu0 0.0
        %475 = vmatpush2.msra.mxu0 0.0
        %476 = vmatprep.subr.mxu0 0.0
        %477 = vmatpush2.msra.mxu0 0.0
        %478 = vmatprep.subr.mxu0 0.0
        %479 = vmatpush2.msra.mxu0 0.0
        %480 = vmatprep.subr.mxu0 0.0
        %481 = vmatpush2.msra.mxu0 0.0
        %482 = vmatprep.subr.mxu0 0.0
        %483 = vmatpush2.msra.mxu0 0.0
        %484 = vmatprep.subr.mxu0 0.0
        %485 = vmatpush2.msra.mxu0 0.0
        %486 = vmatprep.subr.mxu0 0.0
        %487 = vmatpush2.msra.mxu0 0.0
        %488 = vmatprep.subr.mxu0 0.0
        %489 = vmatpush2.msra.mxu0 0.0
        %490 = vmatprep.subr.mxu0 0.0
        %491 = vmatpush2.msra.mxu0 0.0
        %492 = vmatprep.subr.mxu0 0.0
        %493 = vmatpush2.msra.mxu0 0.0
        %494 = vmatprep.subr.mxu0 0.0
        %495 = vmatpush2.msra.mxu0 0.0
        %496 = vmatprep.subr.mxu0 0.0
        %497 = vmatpush2.msra.mxu0 0.0
        %498 = vmatprep.subr.mxu0 0.0
        %499 = vmatpush2.msra.mxu0 0.0
        %500 = vmatprep.mubr.f32.mxu0 0.0
        %501 = vmatmul.mubr.f32.gmra.mxu0 %v429
        %v502 = vpop.f32.mrf.mxu0
        %v503 = vadd.f32 %v424, %v502
        %v504 = vpop.f32.mrf.mxu0
        %v505 = vadd.f32 %v426, %v504
        %506 = vdwg.mxu0
        %507 = vrot.lane.b32.xlu0 %v290, 127
        %v508 = vpop.permute.xlu0 %507
        %509 = vrot.lane.b32.xlu0 %v279, 127
        %v510 = vpop.permute.xlu0 %509
        %511 = vrot.lane.b32.xlu0 %v291, 127
        %v512 = vpop.permute.xlu0 %511
        %513 = vrot.lane.b32.xlu0 %v286, 127
        %v514 = vpop.permute.xlu0 %513
        %vm515 = vcmp.lt.s32.totalorder %v293, 127
        %v516 = vsel %vm515, %v508, %v512
        %v517 = vsel %vm515, %v510, %v514
        %v518 = vsel %vm515, %v512, %v508
        %v519 = vsel %vm515, %v514, %v510
        %v520 = vsel %vm321, 1, 0
        %v521 = vsel %vm322, 1, 0
        %vm522 = vcmp.eq.s32.totalorder %v520, 1
        %vm523 = vcmp.eq.s32.totalorder %v521, 1
        %v524 = vsel %vm522, %v516, 0.0
        %v525 = vsel %vm523, %v518, 0.0
        %v526 = vsel %vm522, %v517, 0.0
        %v527 = vsel %vm523, %v519, 0.0
        %s528 = scalar_lea.vmem [#allocation7], 8
        %v529 = vld [vmem:[%s528] sm:$0xf]
        %v531 = vsel %vm347, %v529, 0
        %v534 = vsel %vm289, %v526, 0
        %v537 = vsel %vm289, %v527, 0
        %539 = vmatprep.subr.mxu0 0.0
        %540 = vmatpush1.msra.mxu0 0.0
        %541 = vmatprep.subr.mxu0 0.0
        %542 = vmatpush1.msra.mxu0 0.0
        %543 = vmatprep.subr.mxu0 0.0
        %544 = vmatpush1.msra.mxu0 0.0
        %545 = vmatprep.subr.mxu0 0.0
        %546 = vmatpush1.msra.mxu0 0.0
        %547 = vmatprep.subr.mxu0 0.0
        %548 = vmatpush1.msra.mxu0 0.0
        %549 = vmatprep.subr.mxu0 0.0
        %550 = vmatpush1.msra.mxu0 0.0
        %551 = vmatprep.subr.mxu0 0.0
        %552 = vmatpush1.msra.mxu0 0.0
        %553 = vmatprep.subr.mxu0 0.0
        %554 = vmatpush1.msra.mxu0 0.0
        %555 = vmatprep.subr.mxu0 0.0
        %556 = vmatpush1.msra.mxu0 0.0
        %557 = vmatprep.subr.mxu0 0.0
        %558 = vmatpush1.msra.mxu0 0.0
        %559 = vmatprep.subr.mxu0 0.0
        %560 = vmatpush1.msra.mxu0 0.0
        %561 = vmatprep.subr.mxu0 0.0
        %562 = vmatpush1.msra.mxu0 0.0
        %563 = vmatprep.subr.mxu0 0.0
        %564 = vmatpush1.msra.mxu0 0.0
        %565 = vmatprep.subr.mxu0 0.0
        %566 = vmatpush1.msra.mxu0 0.0
        %567 = vmatprep.subr.mxu0 %v537
        %568 = vmatpush1.msra.mxu0 %v534
        %569 = vmatprep.subr.mxu0 %v525
        %570 = vmatpush1.msra.mxu0 %v524
        %571 = vmatprep.subr.mxu0 0.0
        %572 = vmatpush2.msra.mxu0 0.0
        %573 = vmatprep.subr.mxu0 0.0
        %574 = vmatpush2.msra.mxu0 0.0
        %575 = vmatprep.subr.mxu0 0.0
        %576 = vmatpush2.msra.mxu0 0.0
        %577 = vmatprep.subr.mxu0 0.0
        %578 = vmatpush2.msra.mxu0 0.0
        %579 = vmatprep.subr.mxu0 0.0
        %580 = vmatpush2.msra.mxu0 0.0
        %581 = vmatprep.subr.mxu0 0.0
        %582 = vmatpush2.msra.mxu0 0.0
        %583 = vmatprep.subr.mxu0 0.0
        %584 = vmatpush2.msra.mxu0 0.0
        %585 = vmatprep.subr.mxu0 0.0
        %586 = vmatpush2.msra.mxu0 0.0
        %587 = vmatprep.subr.mxu0 0.0
        %588 = vmatpush2.msra.mxu0 0.0
        %589 = vmatprep.subr.mxu0 0.0
        %590 = vmatpush2.msra.mxu0 0.0
        %591 = vmatprep.subr.mxu0 0.0
        %592 = vmatpush2.msra.mxu0 0.0
        %593 = vmatprep.subr.mxu0 0.0
        %594 = vmatpush2.msra.mxu0 0.0
        %595 = vmatprep.subr.mxu0 0.0
        %596 = vmatpush2.msra.mxu0 0.0
        %597 = vmatprep.subr.mxu0 0.0
        %598 = vmatpush2.msra.mxu0 0.0
        %599 = vmatprep.subr.mxu0 0.0
        %600 = vmatpush2.msra.mxu0 0.0
        %601 = vmatprep.subr.mxu0 0.0
        %602 = vmatpush2.msra.mxu0 0.0
        %603 = vmatprep.mubr.f32.mxu0 0.0
        %604 = vmatmul.mubr.f32.gmra.mxu0 %v531
        %v605 = vpop.f32.mrf.mxu0
        %v606 = vadd.f32 0.0, %v605
        %v607 = vpop.f32.mrf.mxu0
        %v608 = vadd.f32 0.0, %v607
        %609 = vdwg.mxu0
        %v610 = vadd.f32 %v503, %v606
        %v611 = vadd.f32 %v505, %v608
        %v614 = vcombine.low %v610, %v611
        %616 = vst [vmem:[%s258] sm:$0xff] %v614
        %s617 = sand.u32 %s122, 1
        %s618 = scalar_lea.sflag [#allocation4], %s617
        %s619 = sand.u32 %s122, 1
        %s620 = smul.addr %s619, 8
        %s621 = scalar_lea.vmem [#allocation8], %s620
        // Predicated region
        $region45: #{tpu_custom_call.1} parent=31 // pred_check
          %p622 = pneg %p132
        $region46: #{tpu_custom_call.1} parent=31 // pred_check_branch
          %624 = sbr.rel (%p622) target = $region48
        $region47: #{tpu_custom_call.1} parent=31 // pred_region
          %s625 = smul.u32 2, %s28
          %s627 = ssub.s32 128, 128
          %628 = vsyncadd %s618, %s627
          %s629 = smul.addr %s27, 2
          %s630 = sadd.s32 %s625, %s629
          %s631 = smul.addr %s630, 64
          %s632 = scalar_lea.hbm %s3, %s631
          %s634 = sshll.u32 %s621, 4
          %s635 = int_to_ptr.vmem [resolvable:$true] %s634
          %637 = dma.vmem_to_hbm [thread:$0]  %s635, 128, %s632, %s618
        $region48: #{tpu_custom_call.1} parent=31 // pred_fallthru
          _
      $region32: #{tpu_custom_call.1} parent=5 // pred_fallthru
        _
      %p638 = scmp.le.s32.totalorder 2, %s18
      // Predicated region
      $region49: #{tpu_custom_call.1} parent=5 // pred_check
        %p639 = pneg %p638
      $region50: #{tpu_custom_call.1} parent=5 // pred_check_branch
        %641 = sbr.rel (%p639) target = $region52
      $region51: #{tpu_custom_call.1} parent=5 // pred_region
        %s642 = ssub.s32 %s18, 2
        // Predicated region
        $region53: #{tpu_custom_call.1} parent=51 // pred_check
          %p643 = pneg %p138
        $region54: #{tpu_custom_call.1} parent=51 // pred_check_branch
          %645 = sbr.rel (%p643) target = $region56
        $region55: #{tpu_custom_call.1} parent=51 // pred_region
          %s646 = sand.u32 %s123, 1
          %s647 = scalar_lea.sflag [#allocation4], %s646
          %s648 = sand.u32 %s123, 1
          %s649 = smul.addr %s648, 8
          %s650 = scalar_lea.vmem [#allocation8], %s649
          %651 = dma.done %s647, 128
        $region56: #{tpu_custom_call.1} parent=51 // pred_fallthru
          _
      $region52: #{tpu_custom_call.1} parent=5 // pred_fallthru
        _
    $region6: #{tpu_custom_call.1} parent=1 // loop_footer
      %s22 = sadd.s32 1, %s18
    $region7: #{tpu_custom_call.1} parent=1 // loop_footer_branch
      %17 = sbr.rel target = $region3
    $region8: #{tpu_custom_call.1} parent=1 // loop_exit
      _
    %652 = vsyncpa [#allocation3], 1
    %s653 = scalar_lea.sflag [#allocation3], 1
    %654 = vsyncpa %s653, 1
    %655 = vsyncpa [#allocation6], 1
    %s656 = scalar_lea.sflag [#allocation6], 1
    %657 = vsyncpa %s656, 1
    %658 = vsyncpa [#allocation4], 1
    %s659 = scalar_lea.sflag [#allocation4], 1
    %660 = vsyncpa %s659, 1

</llo_original>
